<compile_context>
chip_gen: v5e
topology: v5e:2x2
jax: 0.10.0
libtpu: 0.0.40
codegen_flags: <defaults>
</compile_context>

<pallas_src>
import jax
import jax.numpy as jnp
from jax.experimental import pallas as pl
from jax.experimental.pallas import tpu as pltpu

_TARGET_BLOCK_BYTES = 4 * 1024 * 1024   # ~4 MiB blocks for the copy fallback
_VMEM_LIMIT_BYTES = 32 * 1024 * 1024    # explicit scoped-VMEM, headroom on all gens


# --------------------------------------------------------------------------
# Primary path: no-op kernel, output aliases input (zero HBM traffic).
# --------------------------------------------------------------------------
def _alias_noop_kernel(x_ref, o_ref):
    # forward() is a no-op; the output buffer is the input buffer via
    # input_output_aliases, so nothing needs to move.  touch() pins a fake
    # read/write dependence so the aliased output counts as produced here.
    del x_ref
    pltpu.touch(o_ref)


def _alias_forward(x):
    return pl.pallas_call(
        _alias_noop_kernel,
        out_shape=jax.ShapeDtypeStruct(x.shape, x.dtype),
        in_specs=[pl.BlockSpec(memory_space=pl.ANY)],
        out_specs=pl.BlockSpec(memory_space=pl.ANY),
        input_output_aliases={0: 0},
        compiler_params=pltpu.CompilerParams(has_side_effects=True),
    )(x)


# --------------------------------------------------------------------------
# Fallback path: tiled lane-dense identity copy (if the alias path ever
# fails to lower on some toolchain).
# --------------------------------------------------------------------------
def _identity_copy_kernel(x_ref, o_ref):
    o_ref[...] = x_ref[...]


def _sublane_multiple(itemsize: int) -> int:
    # 8 for 32-bit, 16 for 16-bit, 32 for 8-bit dtypes (sublane packing).
    return max(8, 8 * (4 // max(1, itemsize)))


def _pick_lane_width(n: int, sublanes: int):
    # Widest lane-dense 2D slab the element count allows.
    for lanes in (1024, 512, 256, 128):
        if n % (sublanes * lanes) == 0:
            return lanes
    return None


def _copy_forward(x):
    orig_shape = x.shape
    n = x.size
    itemsize = x.dtype.itemsize
    sub = _sublane_multiple(itemsize)
    lanes = _pick_lane_width(n, sub)

    if lanes is not None:
        # Lane-dense (rows, lanes) slab; tile over rows with ~4 MiB blocks.
        rows = n // lanes
        x2 = x.reshape(rows, lanes)
        tile_rows = (_TARGET_BLOCK_BYTES // (lanes * itemsize)) // sub * sub
        tile_rows = min(max(sub, tile_rows), rows)
        block = (tile_rows, lanes)
        grid = (pl.cdiv(rows, tile_rows),)
        index_map = lambda i: (i, 0)
    else:
        # Awkward element count: flat (1, n), tiled along the lane axis.
        # A (1, N) VMEM block pads to 8 sublanes, so budget the *padded*
        # footprint (8x) to keep each block at ~4 MiB of real VMEM.
        x2 = x.reshape(1, n)
        lane_tile = max(128, (_TARGET_BLOCK_BYTES // (8 * itemsize)) // 128 * 128)
        if n <= lane_tile:
            block = (1, n)          # full-extent block (no (8,128) constraint)
            grid = (1,)
        else:
            block = (1, lane_tile)  # ragged last block is masked by Pallas
            grid = (pl.cdiv(n, lane_tile),)
        index_map = lambda i: (0, i)

    y2 = pl.pallas_call(
        _identity_copy_kernel,
        out_shape=jax.ShapeDtypeStruct(x2.shape, x2.dtype),
        grid=grid,
        in_specs=[pl.BlockSpec(block, index_map)],
        out_specs=pl.BlockSpec(block, index_map),
        input_output_aliases={0: 0},
        compiler_params=pltpu.CompilerParams(
            dimension_semantics=("parallel",),
            vmem_limit_bytes=_VMEM_LIMIT_BYTES),
    )(x2)
    return y2.reshape(orig_shape)


# --------------------------------------------------------------------------
# Dispatch: probe the zero-copy path once; donate inputs so aliasing is real.
# --------------------------------------------------------------------------
_alias_forward_jit = jax.jit(_alias_forward, donate_argnums=0)
_copy_forward_jit = jax.jit(_copy_forward, donate_argnums=0)

_ALIAS_OK = None


def _alias_path_available() -> bool:
    """One-time probe: does the zero-copy alias kernel lower & pass data through?"""
    global _ALIAS_OK
    if _ALIAS_OK is None:
        try:
            probe = jnp.arange(8 * 128, dtype=jnp.float32).reshape(8, 128)
            expect = jnp.arange(8 * 128, dtype=jnp.float32).reshape(8, 128)
            out = _alias_forward(probe)          # eager, non-donated probe
            jax.block_until_ready(out)
            _ALIAS_OK = bool(jnp.array_equal(out, expect))
        except Exception:
            _ALIAS_OK = False
    return _ALIAS_OK


def network_forward(x: jax.Array) -> jax.Array:
    """Pallas stand-in for Network.forward (the PyTorch forward is a no-op).

    Note: the input buffer is donated (zero-copy aliasing); do not reuse `x`
    after this call.
    """
    if _alias_path_available():
        return _alias_forward_jit(x)
    return _copy_forward_jit(x)


if __name__ == "__main__":
    key = jax.random.PRNGKey(0)
    shape = (2, 4, 16, 16)
    x = jax.random.normal(key, shape, dtype=jnp.float32)
    # `x` is donated to the forward; keep an independent buffer with the same
    # values (same key) for verification.
    x_expected = jax.random.normal(key, shape, dtype=jnp.float32)

    y = network_forward(x)
    jax.block_until_ready(y)
    assert y.shape == shape and y.dtype == jnp.float32
    assert bool(jnp.allclose(y, x_expected))

    # Also sanity-check the tiled-copy fallback path so it is known-good.
    key2 = jax.random.PRNGKey(1)
    z = jax.random.normal(key2, shape, dtype=jnp.float32)
    z_expected = jax.random.normal(key2, shape, dtype=jnp.float32)
    w = _copy_forward_jit(z)
    jax.block_until_ready(w)
    assert w.shape == shape and w.dtype == jnp.float32
    assert bool(jnp.allclose(w, z_expected))

    print("KERNEL_OK")
</pallas_src>

<mosaic_0001>
module attributes {stable_mosaic.version = 11 : i64} {
  func.func @_alias_noop_kernel(%arg0: memref<8x128xf32, #tpu.memory_space<any>>, %arg1: memref<8x128xf32, #tpu.memory_space<any>>) attributes {dimension_semantics = [], scalar_prefetch = 0 : i64, scratch_operands = 0 : i64, tpu.core_type = #tpu.core_type<tc>} {
    return
  }
}

module attributes {stable_mosaic.version = 11 : i64} {
  func.func @_identity_copy_kernel(%arg0: i32, %arg1: memref<8x256xf32, #tpu.memory_space<vmem>>, %arg2: memref<8x256xf32, #tpu.memory_space<vmem>>) attributes {dimension_semantics = [#tpu.dimension_semantics<parallel>], iteration_bounds = array<i64: 1>, scalar_prefetch = 0 : i64, scratch_operands = 0 : i64, tpu.core_type = #tpu.core_type<tc>, window_params = [{transform_indices = @transform_0, window_bounds = array<i64: 8, 256>}, {transform_indices = @transform_1, window_bounds = array<i64: 8, 256>}]} {
    %c0 = arith.constant 0 : index
    %c0_0 = arith.constant 0 : index
    %0 = vector.load %arg1[%c0, %c0_0] : memref<8x256xf32, #tpu.memory_space<vmem>>, vector<8x256xf32>
    %c0_1 = arith.constant 0 : index
    %c0_2 = arith.constant 0 : index
    %1 = vector.load %arg2[%c0_1, %c0_2] : memref<8x256xf32, #tpu.memory_space<vmem>>, vector<8x256xf32>
    tpu.vector_store %arg2[%c0_1, %c0_2], %0 {strides = array<i32>} : memref<8x256xf32, #tpu.memory_space<vmem>>, vector<8x256xf32>,
    return
  }
  func.func @transform_0(%arg0: i32) -> (i32, i32) {
    %c0_i32 = arith.constant 0 : i32
    %c0_i32_0 = arith.constant 0 : i32
    return %arg0, %c0_i32 : i32, i32
  }
  func.func @transform_1(%arg0: i32) -> (i32, i32) {
    %c0_i32 = arith.constant 0 : i32
    %c0_i32_0 = arith.constant 0 : i32
    return %arg0, %c0_i32 : i32, i32
  }
}

</mosaic_0001>

<llo_original>
// kernel: tpu_custom_call.1
$region0: #{tpu_custom_call.1}
  #allocation0 [shape = 'u32[]', space=smem, size = 0x4, offset = 0x4, fixed_abs, tag = 'smem constant byte address 0x4 - core index']
  #allocation1 [shape = 'u32[72,128]{1,0:T(1,128)}', space=vmem, size = 0x9000, scoped, tag = 'internal scratch']
  %s0 = inlined_call_operand.hbm [shape: f32[8,128], index: 0, kind: input, shape index: {}, may-alias: {0,1}]
  %s1 = inlined_call_operand.hbm [shape: f32[8,128], index: 1, kind: output, shape index: {}, may-alias: {0,1}]
  %s2 = sld [smem:[#allocation0]]
  $region2: #{tpu_custom_call.1} parent=0
    _
  %s4 = ssub.s32 1, %s2
  %s5 = scalar_select 0, %s4, %s2

// kernel: _copy_forward.1
$region0: #{_copy_forward.1}
  #allocation0 [shape = 'u32[]', space=smem, size = 0x4, offset = 0x4, fixed_abs, tag = 'smem constant byte address 0x4 - core index']
  #allocation1 [shape = 'u32[72,128]{1,0:T(1,128)}', space=vmem, size = 0x9000, scoped, tag = 'internal scratch']
  %s0 = inlined_call_operand.vmem [shape: f32[8,256], index: 0, kind: input, shape index: {}, may-alias: {0,1}]
  %s1 = inlined_call_operand.vmem [shape: f32[8,256], index: 1, kind: output, shape index: {}, may-alias: {0,1}]
  %s2 = sld [smem:[#allocation0]]
  $region14: #{_copy_forward.1} parent=0
    _
  %s4 = ssub.s32 1, %s2
  %s5 = scalar_select 0, %s4, %s2
  // Predicated region
  $region2: #{_copy_forward.1} parent=0 // pred_check
    _
  $region3: #{_copy_forward.1} parent=0 // pred_check_branch
    %7 = sbr.rel (0) target = $region5
  $region4: #{_copy_forward.1} parent=0 // pred_region
    _
  $region5: #{_copy_forward.1} parent=0 // pred_fallthru
    _
  %v8 = vld [vmem:[%s0] sm:$0xff]
  %v9 = vld [vmem:[%s0 + $0x8] sm:$0xff]
  %10 = vst [vmem:[%s1] sm:$0xff] %v8
  %11 = vst [vmem:[%s1 + $0x8] sm:$0xff] %v9
  // Predicated region
  $region6: #{_copy_forward.1} parent=0 // pred_check
    _
  $region7: #{_copy_forward.1} parent=0 // pred_check_branch
    %13 = sbr.rel (0) target = $region9
  $region8: #{_copy_forward.1} parent=0 // pred_region
    _
  $region9: #{_copy_forward.1} parent=0 // pred_fallthru
    _
  // Predicated region
  $region10: #{_copy_forward.1} parent=0 // pred_check
    _
  $region11: #{_copy_forward.1} parent=0 // pred_check_branch
    %15 = sbr.rel (0) target = $region13
  $region12: #{_copy_forward.1} parent=0 // pred_region
    _
  $region13: #{_copy_forward.1} parent=0 // pred_fallthru
    _

</llo_original>
